<compile_context>
chip_gen: v6e
topology: v6e:2x2x1
jax: 0.10.0
libtpu: 0.0.40
codegen_flags: <defaults>
</compile_context>

<pallas_src>
import jax
import jax.numpy as jnp
from jax.experimental import pallas as pl
from jax.experimental.pallas import tpu as pltpu


def _tpu_generation_params():
    """Return (target_block_bytes, vmem_limit_bytes_or_None, num_tensorcores)."""
    kind = ""
    try:
        kind = jax.devices()[0].device_kind.lower()
    except Exception:
        pass
    if "v7" in kind or "7x" in kind:
        # v7x: 64 MiB VMEM / TC, 3.2 TB/s HBM, 2 TensorCores per chip.
        return 8 * 1024 * 1024, 40 * 1024 * 1024, 2
    if "v6" in kind:
        # v6e: 128 MiB VMEM, 32 MiB scoped default, 1 TC.
        return 4 * 1024 * 1024, None, 1
    if "v5p" in kind or "v4" in kind:
        # Megacore chips: 2 TCs; raise the (small) scoped-VMEM default.
        return 4 * 1024 * 1024, 32 * 1024 * 1024, 2
    if "v5" in kind:
        # v5e: 16 MiB scoped-VMEM default -> keep total buffering at ~8 MiB.
        return 2 * 1024 * 1024, None, 1
    # Unknown generation: conservative.
    return 2 * 1024 * 1024, None, 1


def my_normalizer(tensor: jax.Array, value) -> jax.Array:
    """Pallas TPU implementation of MyNormalizer.forward: tensor + value."""
    orig_shape = tensor.shape

    # torch promotes bool + int to an integer dtype (int64); use int32 under
    # the default JAX config.
    if tensor.dtype == jnp.bool_:
        tensor = tensor.astype(jnp.int32)
    dtype = tensor.dtype

    n = tensor.size
    if n == 0:  # empty tensor: nothing to add
        return jnp.reshape(tensor, orig_shape)

    # Static Python scalar -> bake into the kernel (fastest). Anything else
    # (jax.Array, tracer) -> pass through SMEM so the kernel is value-agnostic.
    value_is_static = isinstance(value, (bool, int, float))

    # Widest lane dim that divides n -> no host-side padding for most shapes,
    # long contiguous DMA rows, unmasked lane-dense stores.
    lanes = None
    for cand in (1024, 512, 256, 128):
        if n % cand == 0:
            lanes = cand
            break

    flat = jnp.reshape(tensor, (-1,))
    if lanes is None:
        # TODO(synk): fuse the ragged tail in-kernel (masked 1-D tail path) to
        # avoid the extra pad/slice HBM passes; rare case, kept simple here.
        lanes = 128
        n_pad = pl.cdiv(n, lanes) * lanes
        flat = jnp.pad(flat, (0, n_pad - n))
    else:
        n_pad = n

    rows = n_pad // lanes
    x2d = jnp.reshape(flat, (rows, lanes))

    elem_bytes = jnp.dtype(dtype).itemsize
    sub = max(8, 32 // max(elem_bytes, 1))     # dtype-aware sublane packing

    block_bytes, vmem_limit, num_tc = _tpu_generation_params()

    if rows <= sub:
        # Tiny array: one block equal to the full array (divisibility exempt).
        tile_rows = rows
    else:
        tile_rows = block_bytes // (lanes * elem_bytes)
        tile_rows = max(sub, min((tile_rows // sub) * sub, (rows // sub) * sub))
        if num_tc > 1:
            # Shard grid steps across TensorCores: aim for >= 2 balanced steps
            # per core (one per core for medium inputs). Single-TC chips skip
            # this entirely.
            want = 2 * num_tc if rows >= 2 * num_tc * sub else num_tc
            if pl.cdiv(rows, tile_rows) < want:
                tile_rows = max(sub, (pl.cdiv(rows, want) // sub) * sub)

    grid = (pl.cdiv(rows, tile_rows),)

    x_spec = pl.BlockSpec((tile_rows, lanes), lambda i: (i, 0))
    o_spec = pl.BlockSpec((tile_rows, lanes), lambda i: (i, 0))
    out_shape = jax.ShapeDtypeStruct((rows, lanes), dtype)

    cp_kwargs = dict(dimension_semantics=("parallel",))
    if vmem_limit is not None:
        cp_kwargs["vmem_limit_bytes"] = vmem_limit
    compiler_params = pltpu.CompilerParams(**cp_kwargs)

    cost = pl.CostEstimate(
        flops=n_pad, transcendentals=0, bytes_accessed=2 * n_pad * elem_bytes
    )

    if value_is_static:
        def kernel(x_ref, o_ref):
            # `value` is a Python scalar closed over at trace time; weak typing
            # keeps the tensor dtype (matches PyTorch `tensor + int` semantics).
            o_ref[...] = x_ref[...] + value

        out2d = pl.pallas_call(
            kernel,
            out_shape=out_shape,
            grid_spec=pl.GridSpec(grid=grid, in_specs=[x_spec], out_specs=o_spec),
            compiler_params=compiler_params,
            cost_estimate=cost,
        )(x2d)
    else:
        # Runtime value: ship it as a 32-bit SMEM scalar (no retrace per value),
        # cast to the tensor dtype inside the kernel.
        scalar_dtype = jnp.float32 if jnp.issubdtype(dtype, jnp.floating) else jnp.int32
        val2d = jnp.asarray(value, dtype=scalar_dtype).reshape(1, 1)

        def kernel(v_ref, x_ref, o_ref):
            o_ref[...] = x_ref[...] + v_ref[0, 0].astype(dtype)

        out2d = pl.pallas_call(
            kernel,
            out_shape=out_shape,
            grid_spec=pl.GridSpec(
                grid=grid,
                in_specs=[
                    pl.BlockSpec(memory_space=pltpu.MemorySpace.SMEM),
                    x_spec,
                ],
                out_specs=o_spec,
            ),
            compiler_params=compiler_params,
            cost_estimate=cost,
        )(val2d, x2d)

    out_flat = jnp.reshape(out2d, (-1,))
    if n_pad != n:
        out_flat = out_flat[:n]
    return jnp.reshape(out_flat, orig_shape)


if __name__ == "__main__":
    key = jax.random.PRNGKey(0)
    # Small NCHW-shaped input consistent with a typical conv-style feed.
    x = jax.random.normal(key, (2, 4, 16, 16), dtype=jnp.float32)
    value = 3  # MyNormalizer(value=3)

    # Static (trace-time constant) value path.
    out = my_normalizer(x, value)
    out = jax.block_until_ready(out)
    ref = x + value
    assert out.shape == x.shape and out.dtype == x.dtype
    assert jnp.array_equal(out, ref), "static-value path mismatch vs reference"

    # Runtime (SMEM scalar) value path.
    out_dyn = my_normalizer(x, jnp.int32(5))
    out_dyn = jax.block_until_ready(out_dyn)
    assert jnp.array_equal(out_dyn, x + 5), "runtime-value path mismatch vs reference"

    print("KERNEL_OK")
</pallas_src>

<mosaic_0001>
module attributes {stable_mosaic.version = 11 : i64} {
  func.func @kernel(%arg0: i32, %arg1: memref<2x1024xf32, #tpu.memory_space<vmem>>, %arg2: memref<2x1024xf32, #tpu.memory_space<vmem>>) attributes {dimension_semantics = [#tpu.dimension_semantics<parallel>], iteration_bounds = array<i64: 1>, scalar_prefetch = 0 : i64, scratch_operands = 0 : i64, tpu.core_type = #tpu.core_type<tc>, window_params = [{transform_indices = @transform_0, window_bounds = array<i64: 2, 1024>}, {transform_indices = @transform_1, window_bounds = array<i64: 2, 1024>}]} {
    %c0 = arith.constant 0 : index
    %c0_0 = arith.constant 0 : index
    %0 = vector.load %arg1[%c0, %c0_0] : memref<2x1024xf32, #tpu.memory_space<vmem>>, vector<2x1024xf32>
    %cst = arith.constant 3.000000e+00 : f32
    %1 = vector.broadcast %cst : f32 to vector<2x1024xf32>
    %2 = arith.addf %0, %1 : vector<2x1024xf32>
    %c0_1 = arith.constant 0 : index
    %c0_2 = arith.constant 0 : index
    %3 = vector.load %arg2[%c0_1, %c0_2] : memref<2x1024xf32, #tpu.memory_space<vmem>>, vector<2x1024xf32>
    tpu.vector_store %arg2[%c0_1, %c0_2], %2 {strides = array<i32>} : memref<2x1024xf32, #tpu.memory_space<vmem>>, vector<2x1024xf32>,
    return
  }
  func.func @transform_0(%arg0: i32) -> (i32, i32) {
    %c0_i32 = arith.constant 0 : i32
    %c0_i32_0 = arith.constant 0 : i32
    return %arg0, %c0_i32 : i32, i32
  }
  func.func @transform_1(%arg0: i32) -> (i32, i32) {
    %c0_i32 = arith.constant 0 : i32
    %c0_i32_0 = arith.constant 0 : i32
    return %arg0, %c0_i32 : i32, i32
  }
}

</mosaic_0001>

<llo_original>
// kernel: tpu_custom_call.1
$region0: #{tpu_custom_call.1}
  #allocation0 [shape = 'u32[]', space=smem, size = 0x4, offset = 0x4, fixed_abs, tag = 'smem constant byte address 0x4 - core index']
  #allocation1 [shape = 'u32[144,128]{1,0:T(1,128)}', space=vmem, size = 0x12000, scoped, tag = 'internal scratch']
  %s0 = inlined_call_operand.hbm [shape: f32[2,1024], index: 0, kind: input, shape index: {}]
  %s1 = inlined_call_operand.hbm [shape: f32[2,1024], index: 1, kind: output, shape index: {}]
  %s2 = sld [smem:[#allocation0]]
  $region18: #{tpu_custom_call.1} parent=0
    _
  %s4 = ssub.s32 1, %s2
  %s5 = scalar_select 0, %s4, %s2
  $region1: #{tpu_custom_call.1} parent=0
    #allocation2 [shape = 'u8[8192]{0}', space=vmem, size = 0x2000, scoped, tag = 'input window, operand 0, single buffered']
    #allocation3 [shape = 's32[1]{0}', space=sflag, size = 0x4, scoped, tag = 'scoped memory for tpu_custom_call.1']
    #allocation4 [shape = 's32[1]{0}', space=sflag, size = 0x4, scoped, tag = 'scoped memory for tpu_custom_call.1']
    #allocation5 [shape = 'u8[8192]{0}', space=vmem, size = 0x2000, scoped, tag = 'output window, operand 0, single buffered']
    %6 = vsyncpa [#allocation3], 0
    %7 = vsyncpa [#allocation4], 0
    // Predicated region
    $region2: #{tpu_custom_call.1} parent=1 // pred_check
      _
    $region3: #{tpu_custom_call.1} parent=1 // pred_check_branch
      %9 = sbr.rel (0) target = $region5
    $region4: #{tpu_custom_call.1} parent=1 // pred_region
      %s11 = ssub.s32 256, 256
      %12 = vsyncadd [#allocation3], %s11
      %s14 = sshll.u32 [#allocation2], 4
      %s15 = int_to_ptr.vmem [resolvable:$true] %s14
      %17 = dma.hbm_to_vmem [thread:$0]  %s0, 256, %s15, [#allocation3]
    $region5: #{tpu_custom_call.1} parent=1 // pred_fallthru
      _
    // Predicated region
    $region6: #{tpu_custom_call.1} parent=1 // pred_check
      _
    $region7: #{tpu_custom_call.1} parent=1 // pred_check_branch
      %19 = sbr.rel (0) target = $region9
    $region8: #{tpu_custom_call.1} parent=1 // pred_region
      %20 = dma.done [#allocation3], 256
    $region9: #{tpu_custom_call.1} parent=1 // pred_fallthru
      _
    %v21 = vld [vmem:[#allocation2] sm:$0xff]
    %v22 = vld [vmem:[#allocation2 + $0x8] sm:$0xff]
    %v23 = vadd.f32 %v21, 3.0
    %v24 = vadd.f32 %v22, 3.0
    %25 = vst [vmem:[#allocation5] sm:$0xff] %v23
    %26 = vst [vmem:[#allocation5 + $0x8] sm:$0xff] %v24
    // Predicated region
    $region10: #{tpu_custom_call.1} parent=1 // pred_check
      _
    $region11: #{tpu_custom_call.1} parent=1 // pred_check_branch
      %28 = sbr.rel (0) target = $region13
    $region12: #{tpu_custom_call.1} parent=1 // pred_region
      %s30 = ssub.s32 256, 256
      %31 = vsyncadd [#allocation4], %s30
      %s33 = sshll.u32 [#allocation5], 4
      %s34 = int_to_ptr.vmem [resolvable:$true] %s33
      %36 = dma.vmem_to_hbm [thread:$0]  %s34, 256, %s1, [#allocation4]
    $region13: #{tpu_custom_call.1} parent=1 // pred_fallthru
      _
    // Predicated region
    $region14: #{tpu_custom_call.1} parent=1 // pred_check
      _
    $region15: #{tpu_custom_call.1} parent=1 // pred_check_branch
      %38 = sbr.rel (0) target = $region17
    $region16: #{tpu_custom_call.1} parent=1 // pred_region
      %39 = dma.done [#allocation4], 256
    $region17: #{tpu_custom_call.1} parent=1 // pred_fallthru
      _
    %40 = vsyncpa [#allocation3], 1
    %41 = vsyncpa [#allocation4], 1

</llo_original>
